<compile_context>
chip_gen: v5e
topology: v5e:2x2
jax: 0.10.0
libtpu: 0.0.40
codegen_flags: <defaults>
</compile_context>

<pallas_src>
import functools

import numpy as np
import jax
import jax.numpy as jnp
from jax.experimental import pallas as pl
from jax.experimental.pallas import tpu as pltpu


# ----------------------------------------------------------------------------
# tiling / launch policy
# ----------------------------------------------------------------------------
_VMEM_STEP_BUDGET = 8 * 1024 * 1024     # per-grid-step double-buffered bytes
_PALLAS_MIN_BYTES = 64 * 1024           # below this, plain jnp is cheaper

_CPARAMS = pltpu.CompilerParams(
    dimension_semantics=("parallel",),
    vmem_limit_bytes=32 * 1024 * 1024,  # headroom; tiles are budgeted below it
)


def _choose_tile(B, io_cols, itemsize):
    """Batch (row) tile.

    io_cols = sum of widths of all input + output tiles (f32 columns moved
    per row per grid step).  Working set per step = 2 (double buffer) *
    io_cols * itemsize bytes per row; keep it under _VMEM_STEP_BUDGET.
    Guarantee >= 2 grid steps when B >= 16 so the "parallel" axis can shard
    across v7x's two TensorCores (costs nothing on single-TC v5e/v6e).
    """
    if B <= 8:
        return B                                    # full-dim block is legal
    bytes_per_row = 2 * io_cols * itemsize
    tb = max(8, (_VMEM_STEP_BUDGET // max(bytes_per_row, 1)) // 8 * 8)
    if B >= 16:
        tb = min(tb, max(8, (B // 2) // 8 * 8))     # at least 2 grid steps
    return min(tb, B)


def _row_spec(tb, width):
    return pl.BlockSpec((tb, width), lambda i: (i, 0))


def _cost(bytes_accessed):
    return pl.CostEstimate(flops=0, transcendentals=0,
                           bytes_accessed=int(bytes_accessed))


# ----------------------------------------------------------------------------
# kernels (pure copies; one lane-dense store per output tile)
# ----------------------------------------------------------------------------
def _split_kernel(keep, z_ref, a_ref, b_ref):
    z = z_ref[...]
    a_ref[...] = z[:, :keep]
    b_ref[...] = z[:, keep:]


def _concat_many_kernel(*refs):
    parts, out_ref = refs[:-1], refs[-1]
    out_ref[...] = jnp.concatenate([p[...] for p in parts], axis=1)


def _rev_pop_kernel(n_cut, z_ref, x_ref, znew_ref, rest_ref):
    # fused: z_new = concat(z, x[:, :n_cut]) ; rest = x[:, n_cut:]
    x = x_ref[...]
    znew_ref[...] = jnp.concatenate([z_ref[...], x[:, :n_cut]], axis=1)
    rest_ref[...] = x[:, n_cut:]


# ----------------------------------------------------------------------------
# wrappers
# ----------------------------------------------------------------------------
def pallas_split(z, keep):
    """(z[:, :keep], z[:, keep:]) as one batch-gridded Pallas copy kernel."""
    B, L = z.shape
    rest = L - keep
    itemsize = jnp.dtype(z.dtype).itemsize
    if keep <= 0 or rest <= 0 or B * L * itemsize < _PALLAS_MIN_BYTES:
        return z[:, :keep], z[:, keep:]             # tiny / degenerate: no launch
    tb = _choose_tile(B, 2 * L, itemsize)
    return pl.pallas_call(
        functools.partial(_split_kernel, keep),
        grid=(pl.cdiv(B, tb),),
        in_specs=[_row_spec(tb, L)],
        out_specs=[_row_spec(tb, keep), _row_spec(tb, rest)],
        out_shape=(jax.ShapeDtypeStruct((B, keep), z.dtype),
                   jax.ShapeDtypeStruct((B, rest), z.dtype)),
        compiler_params=_CPARAMS,
        cost_estimate=_cost(2 * B * L * itemsize),
    )(z)


def pallas_concat_many(parts):
    """concatenate(parts, axis=1) as one batch-gridded Pallas copy kernel."""
    parts = [p for p in parts if p.shape[-1] > 0]
    if len(parts) == 1:
        return parts[0]
    B = parts[0].shape[0]
    widths = [p.shape[-1] for p in parts]
    W = sum(widths)
    itemsize = jnp.dtype(parts[0].dtype).itemsize
    if B * W * itemsize < _PALLAS_MIN_BYTES:
        return jnp.concatenate(parts, axis=1)
    tb = _choose_tile(B, 2 * W, itemsize)
    return pl.pallas_call(
        _concat_many_kernel,
        grid=(pl.cdiv(B, tb),),
        in_specs=[_row_spec(tb, w) for w in widths],
        out_specs=_row_spec(tb, W),
        out_shape=jax.ShapeDtypeStruct((B, W), parts[0].dtype),
        compiler_params=_CPARAMS,
        cost_estimate=_cost(2 * B * W * itemsize),
    )(*parts)


def fused_reverse_pop(z, x, n_cut):
    """Fused: (concat(z, x[:, :n_cut]), x[:, n_cut:]) in one pallas_call."""
    B, lz = z.shape
    _, lx = x.shape
    itemsize = jnp.dtype(z.dtype).itemsize
    if B * (lz + lx) * itemsize < _PALLAS_MIN_BYTES:
        return jnp.concatenate([z, x[:, :n_cut]], axis=1), x[:, n_cut:]
    tb = _choose_tile(B, 2 * (lz + lx), itemsize)
    return pl.pallas_call(
        functools.partial(_rev_pop_kernel, n_cut),
        grid=(pl.cdiv(B, tb),),
        in_specs=[_row_spec(tb, lz), _row_spec(tb, lx)],
        out_specs=[_row_spec(tb, lz + n_cut), _row_spec(tb, lx - n_cut)],
        out_shape=(jax.ShapeDtypeStruct((B, lz + n_cut), z.dtype),
                   jax.ShapeDtypeStruct((B, lx - n_cut), z.dtype)),
        compiler_params=_CPARAMS,
        cost_estimate=_cost(2 * B * (lz + lx) * itemsize),
    )(z, x)


# ----------------------------------------------------------------------------
# JAX/Pallas squeezing module (same observable semantics as PyTorch)
# ----------------------------------------------------------------------------
class Squeezing:
    """self.x is kept as a list of column slabs (lazy concat): the forward
    accumulate branch never re-copies the already-accumulated columns."""

    def __init__(self, n_dim, n_cut=1):
        self.n_dim = n_dim
        self.n_cut = n_cut
        self._x_parts = None   # None, or non-empty list of (B, w) slabs

    @property
    def x(self):
        """Materialized side-buffer (test/introspection only)."""
        if self._x_parts is None:
            return None
        if len(self._x_parts) == 1:
            return self._x_parts[0]
        return jnp.concatenate(self._x_parts, axis=1)

    def forward(self, inputs, reverse=False):
        z = inputs
        n_length = z.shape[-1]
        n_cut = self.n_cut
        if not reverse:
            if n_length < n_cut:
                raise Exception()
            if self.n_dim == n_length:
                if self.n_dim > 2 * n_cut:
                    if self._x_parts is not None:
                        raise Exception()
                    z, cut = pallas_split(z, n_length - n_cut)
                    self._x_parts = [cut]
                else:
                    self._x_parts = None
            elif n_length - n_cut <= n_cut:
                if self._x_parts is None:
                    raise Exception()
                z = pallas_concat_many([z] + self._x_parts)
                self._x_parts = None
            else:
                # accumulate: ONLY the new n_cut columns move; old slabs untouched
                z, cut = pallas_split(z, n_length - n_cut)
                self._x_parts = [cut] + self._x_parts
        else:
            if self.n_dim == n_length:
                n_start = self.n_dim % n_cut
                if n_start == 0:
                    n_start += n_cut
                x_length = n_length - n_start
                if x_length < n_cut:
                    raise Exception()
                if x_length == n_cut:
                    # split-then-pop returns z unchanged, buffer emptied
                    self._x_parts = None
                    return z
                # split + immediate pop collapse into a single split
                z, rest = pallas_split(z, n_start + n_cut)
                self._x_parts = [rest]
                return z
            if self._x_parts is None:
                raise Exception()
            x_length = sum(p.shape[-1] for p in self._x_parts)
            if x_length < n_cut:
                raise Exception()
            front = self._x_parts[0]
            rest_parts = self._x_parts[1:]
            if front.shape[-1] < n_cut:
                # defensive: collapse slabs (cannot occur with reference-shaped use)
                front = pallas_concat_many([front] + rest_parts)
                rest_parts = []
            if front.shape[-1] == n_cut:
                z = pallas_concat_many([z, front])
            else:
                z, front_rest = fused_reverse_pop(z, front, n_cut)
                rest_parts = [front_rest] + rest_parts
            self._x_parts = rest_parts if rest_parts else None
        return z

    __call__ = forward


# ----------------------------------------------------------------------------
# Pure-numpy reference (verbatim semantics of the PyTorch module)
# ----------------------------------------------------------------------------
class SqueezingRef:
    def __init__(self, n_dim, n_cut=1):
        self.n_dim = n_dim
        self.n_cut = n_cut
        self.x = None

    def forward(self, inputs, reverse=False):
        z = inputs
        n_length = z.shape[-1]
        if not reverse:
            if n_length < self.n_cut:
                raise Exception()
            if self.n_dim == n_length:
                if self.n_dim > 2 * self.n_cut:
                    if self.x is not None:
                        raise Exception()
                    self.x = z[:, n_length - self.n_cut:]
                    z = z[:, :n_length - self.n_cut]
                else:
                    self.x = None
            elif n_length - self.n_cut <= self.n_cut:
                z = np.concatenate((z, self.x), 1)
                self.x = None
            else:
                cut = z[:, n_length - self.n_cut:]
                self.x = np.concatenate((cut, self.x), 1)
                z = z[:, :n_length - self.n_cut]
        else:
            if self.n_dim == n_length:
                n_start = self.n_dim % self.n_cut
                if n_start == 0:
                    n_start += self.n_cut
                self.x = z[:, n_start:]
                z = z[:, :n_start]
            x_length = self.x.shape[-1]
            if x_length < self.n_cut:
                raise Exception()
            cut = self.x[:, :self.n_cut]
            z = np.concatenate((z, cut), 1)
            if x_length - self.n_cut == 0:
                self.x = None
            else:
                self.x = self.x[:, self.n_cut:]
        return z


# ----------------------------------------------------------------------------
# test harness
# ----------------------------------------------------------------------------
def _run_case(n_dim, n_cut, batch, key, n_steps=3):
    x0 = jax.random.normal(key, (batch, n_dim), dtype=jnp.float32)
    x0_np = np.asarray(x0)

    mod = Squeezing(n_dim, n_cut)
    ref = SqueezingRef(n_dim, n_cut)

    def check(z, z_ref):
        np.testing.assert_allclose(np.asarray(z), z_ref, rtol=0, atol=0)
        mx = mod.x
        if mx is None:
            assert ref.x is None
        else:
            np.testing.assert_allclose(np.asarray(mx), ref.x, rtol=0, atol=0)

    z, z_ref = x0, x0_np
    for _ in range(n_steps):                 # forward squeeze sweep
        z = jax.block_until_ready(mod(z, reverse=False))
        z_ref = ref.forward(z_ref, reverse=False)
        check(z, z_ref)
    for _ in range(n_steps):                 # reverse (un-squeeze) sweep
        z = jax.block_until_ready(mod(z, reverse=True))
        z_ref = ref.forward(z_ref, reverse=True)
        check(z, z_ref)


if __name__ == "__main__":
    key = jax.random.PRNGKey(0)
    k_small, k_aligned, k_ragged = jax.random.split(key, 3)

    # tiny problem: exercises the small-problem jnp fallback path
    _run_case(n_dim=16, n_cut=4, batch=2, key=k_small)

    # lane-aligned widths (n_cut multiple of 128): unmasked full-width stores,
    # >=2 grid steps for v7x megacore sharding
    _run_case(n_dim=512, n_cut=128, batch=1024, key=k_aligned)

    # non-aligned n_cut + ragged batch (B % 8 != 0, B % tile != 0):
    # exercises masked last-tile writes and non-128-aligned split boundaries
    _run_case(n_dim=256, n_cut=64, batch=1037, key=k_ragged)

    print("KERNEL_OK")
</pallas_src>

<mosaic_0001>
module attributes {stable_mosaic.version = 11 : i64} {
  func.func @_split_kernel(%arg0: i32, %arg1: memref<512x512xf32, #tpu.memory_space<vmem>>, %arg2: memref<512x384xf32, #tpu.memory_space<vmem>>, %arg3: memref<512x128xf32, #tpu.memory_space<vmem>>) attributes {dimension_semantics = [#tpu.dimension_semantics<parallel>], iteration_bounds = array<i64: 2>, scalar_prefetch = 0 : i64, scratch_operands = 0 : i64, tpu.core_type = #tpu.core_type<tc>, window_params = [{transform_indices = @transform_0, window_bounds = array<i64: 512, 512>}, {transform_indices = @transform_1, window_bounds = array<i64: 512, 384>}, {transform_indices = @transform_2, window_bounds = array<i64: 512, 128>}]} {
    %c0 = arith.constant 0 : index
    %c0_0 = arith.constant 0 : index
    %0 = vector.load %arg1[%c0, %c0_0] : memref<512x512xf32, #tpu.memory_space<vmem>>, vector<512x512xf32>
    %1 = vector.extract_strided_slice %0 {offsets = [0, 0], sizes = [512, 384], strides = [1, 1]} : vector<512x512xf32> to vector<512x384xf32>
    %c0_1 = arith.constant 0 : index
    %c0_2 = arith.constant 0 : index
    %2 = vector.load %arg2[%c0_1, %c0_2] : memref<512x384xf32, #tpu.memory_space<vmem>>, vector<512x384xf32>
    tpu.vector_store %arg2[%c0_1, %c0_2], %1 {strides = array<i32>} : memref<512x384xf32, #tpu.memory_space<vmem>>, vector<512x384xf32>,
    %3 = vector.extract_strided_slice %0 {offsets = [0, 384], sizes = [512, 128], strides = [1, 1]} : vector<512x512xf32> to vector<512x128xf32>
    %c0_3 = arith.constant 0 : index
    %c0_4 = arith.constant 0 : index
    %4 = vector.load %arg3[%c0_3, %c0_4] : memref<512x128xf32, #tpu.memory_space<vmem>>, vector<512x128xf32>
    tpu.vector_store %arg3[%c0_3, %c0_4], %3 {strides = array<i32>} : memref<512x128xf32, #tpu.memory_space<vmem>>, vector<512x128xf32>,
    return
  }
  func.func @transform_0(%arg0: i32) -> (i32, i32) {
    %c0_i32 = arith.constant 0 : i32
    %c0_i32_0 = arith.constant 0 : i32
    return %arg0, %c0_i32 : i32, i32
  }
  func.func @transform_1(%arg0: i32) -> (i32, i32) {
    %c0_i32 = arith.constant 0 : i32
    %c0_i32_0 = arith.constant 0 : i32
    return %arg0, %c0_i32 : i32, i32
  }
  func.func @transform_2(%arg0: i32) -> (i32, i32) {
    %c0_i32 = arith.constant 0 : i32
    %c0_i32_0 = arith.constant 0 : i32
    return %arg0, %c0_i32 : i32, i32
  }
}

</mosaic_0001>

<llo_original>
// kernel: tpu_custom_call.1
$region0: #{tpu_custom_call.1}
  #allocation0 [shape = 'u32[]', space=smem, size = 0x4, offset = 0x4, fixed_abs, tag = 'smem constant byte address 0x4 - core index']
  #allocation1 [shape = 'u32[72,128]{1,0:T(1,128)}', space=vmem, size = 0x9000, scoped, tag = 'internal scratch']
  %s0 = inlined_call_operand.hbm [shape: f32[1024,512], index: 0, kind: input, shape index: {}]
  %s1 = inlined_call_operand.hbm [shape: f32[1024,384], index: 1, kind: output, shape index: {0}]
  %s2 = inlined_call_operand.hbm [shape: f32[1024,128], index: 2, kind: output, shape index: {1}]
  %3 = xla_tuple %s1, %s2
  %s4 = sld [smem:[#allocation0]]
  $region49: #{tpu_custom_call.1} parent=0
    _
  %s6 = ssub.s32 1, %s4
  %s7 = scalar_select 0, %s6, %s4
  $region1: #{tpu_custom_call.1} parent=0
    #allocation2 [shape = 'u8[2097152]{0}', space=vmem, size = 0x200000, scoped, tag = 'input window, operand 0']
    #allocation3 [shape = 's32[2]{0}', space=sflag, size = 0x8, scoped, tag = 'scoped memory for tpu_custom_call.1']
    #allocation4 [shape = 's32[2]{0}', space=sflag, size = 0x8, scoped, tag = 'scoped memory for tpu_custom_call.1']
    #allocation5 [shape = 'u8[1572864]{0}', space=vmem, size = 0x180000, scoped, tag = 'output window, operand 0']
    #allocation6 [shape = 'u8[524288]{0}', space=vmem, size = 0x80000, scoped, tag = 'output window, operand 1']
    #allocation7 [shape = 's32[2]{0}', space=sflag, size = 0x8, scoped, tag = 'scoped memory for tpu_custom_call.1']
    %8 = vsyncpa [#allocation3], 0
    %s9 = scalar_lea.sflag [#allocation3], 1
    %10 = vsyncpa %s9, 0
    %11 = vsyncpa [#allocation4], 0
    %s12 = scalar_lea.sflag [#allocation4], 1
    %13 = vsyncpa %s12, 0
    %14 = vsyncpa [#allocation7], 0
    %s15 = scalar_lea.sflag [#allocation7], 1
    %16 = vsyncpa %s15, 0
    loop: start=0, step=1, limit=4
    $region2: #{tpu_custom_call.1} parent=1 // loop_pre_header
      _
    $region3: #{tpu_custom_call.1} parent=1 // loop_header
      %s18 = sphi 0, %s22
      %p19 = scmp.ge.s32.totalorder %s18, 4
      %s28 = sphi 0, %s30
      %s31 = sphi 0, %s28
      %s32 = sphi 0, %s31
      %s48 = sphi 0, %s32
      %s54 = sphi 0, %s56
      %s57 = sphi 0, %s54
      %s58 = sphi 0, %s57
      %s74 = sphi 0, %s58
      %s80 = sphi 0, %s82
      %s83 = sphi 0, %s80
      %s84 = sphi 0, %s83
      %s100 = sphi 0, %s84
    $region4: #{tpu_custom_call.1} parent=1 // loop_header_branch
      %21 = sbr.rel (%p19) target = $region8
    $region5: #{tpu_custom_call.1} parent=1 // loop_body
      %s23 = ssub.s32 %s18, 1
      %s24 = ssub.s32 %s18, 2
      %s25 = sadd.s32 %s18, 1
      %s26 = ssub.s32 %s18, %s25
      %p27 = scmp.eq.s32.totalorder %s26, 0
      %s29 = sadd.s32 %s28, 1
      %s30 = scalar_select %p27, %s28, %s29
      %p33 = pneg %p27
      %p34 = scmp.eq.s32.totalorder %s18, 1
      %p35 = por %p33, %p34
      %p36 = scmp.ne.s32.totalorder %s28, %s31
      %p37 = scmp.eq.s32.totalorder %s18, 0
      %p38 = por %p36, %p37
      %p39 = scmp.ne.s32.totalorder %s28, %s31
      %p40 = scmp.eq.s32.totalorder %s23, 1
      %p41 = por %p39, %p40
      %p42 = scmp.ne.s32.totalorder %s31, %s32
      %p43 = scmp.eq.s32.totalorder %s23, 0
      %p44 = por %p42, %p43
      %p45 = scmp.ne.s32.totalorder %s31, %s32
      %p46 = scmp.eq.s32.totalorder %s24, 1
      %p47 = por %p45, %p46
      %p49 = scmp.ne.s32.totalorder %s32, %s48
      %p50 = scmp.eq.s32.totalorder %s24, 0
      %p51 = por %p49, %p50
      %s52 = ssub.s32 %s18, %s25
      %p53 = scmp.eq.s32.totalorder %s52, 0
      %s55 = sadd.s32 %s54, 1
      %s56 = scalar_select %p53, %s54, %s55
      %p59 = pneg %p53
      %p60 = scmp.eq.s32.totalorder %s18, 1
      %p61 = por %p59, %p60
      %p62 = scmp.ne.s32.totalorder %s54, %s57
      %p63 = scmp.eq.s32.totalorder %s18, 0
      %p64 = por %p62, %p63
      %p65 = scmp.ne.s32.totalorder %s54, %s57
      %p66 = scmp.eq.s32.totalorder %s23, 1
      %p67 = por %p65, %p66
      %p68 = scmp.ne.s32.totalorder %s57, %s58
      %p69 = scmp.eq.s32.totalorder %s23, 0
      %p70 = por %p68, %p69
      %p71 = scmp.ne.s32.totalorder %s57, %s58
      %p72 = scmp.eq.s32.totalorder %s24, 1
      %p73 = por %p71, %p72
      %p75 = scmp.ne.s32.totalorder %s58, %s74
      %p76 = scmp.eq.s32.totalorder %s24, 0
      %p77 = por %p75, %p76
      %s78 = ssub.s32 %s18, %s25
      %p79 = scmp.eq.s32.totalorder %s78, 0
      %s81 = sadd.s32 %s80, 1
      %s82 = scalar_select %p79, %s80, %s81
      %p85 = pneg %p79
      %p86 = scmp.eq.s32.totalorder %s18, 1
      %p87 = por %p85, %p86
      %p88 = scmp.ne.s32.totalorder %s80, %s83
      %p89 = scmp.eq.s32.totalorder %s18, 0
      %p90 = por %p88, %p89
      %p91 = scmp.ne.s32.totalorder %s80, %s83
      %p92 = scmp.eq.s32.totalorder %s23, 1
      %p93 = por %p91, %p92
      %p94 = scmp.ne.s32.totalorder %s83, %s84
      %p95 = scmp.eq.s32.totalorder %s23, 0
      %p96 = por %p94, %p95
      %p97 = scmp.ne.s32.totalorder %s83, %s84
      %p98 = scmp.eq.s32.totalorder %s24, 1
      %p99 = por %p97, %p98
      %p101 = scmp.ne.s32.totalorder %s84, %s100
      %p102 = scmp.eq.s32.totalorder %s24, 0
      %p103 = por %p101, %p102
      %p104 = scmp.le.s32.totalorder 1, %s18
      %p105 = scmp.lt.s32.totalorder %s18, 3
      %p106 = pnand %p104, %p105
      %p107 = pneg %p106
      // Predicated region
      $region9: #{tpu_custom_call.1} parent=5 // pred_check
        _
      $region10: #{tpu_custom_call.1} parent=5 // pred_check_branch
        %109 = sbr.rel (%p106) target = $region12
      $region11: #{tpu_custom_call.1} parent=5 // pred_region
        %s110 = ssub.s32 %s18, 1
      $region12: #{tpu_custom_call.1} parent=5 // pred_fallthru
        _
      %p111 = scmp.lt.s32.totalorder %s18, 2
      // Predicated region
      $region13: #{tpu_custom_call.1} parent=5 // pred_check
        %p112 = pneg %p111
      $region14: #{tpu_custom_call.1} parent=5 // pred_check_branch
        %114 = sbr.rel (%p112) target = $region16
      $region15: #{tpu_custom_call.1} parent=5 // pred_region
        // Predicated region
        $region17: #{tpu_custom_call.1} parent=15 // pred_check
          %p115 = pneg %p38
        $region18: #{tpu_custom_call.1} parent=15 // pred_check_branch
          %117 = sbr.rel (%p115) target = $region20
        $region19: #{tpu_custom_call.1} parent=15 // pred_region
          %s118 = sand.u32 %s28, 1
          %s119 = scalar_lea.sflag [#allocation3], %s118
          %s120 = sand.u32 %s28, 1
          %s121 = smul.addr %s120, 2048
          %s122 = scalar_lea.vmem [#allocation2], %s121
          %s123 = smul.u32 64, %s18
          %125 = vsyncadd %s119, 0
          %s126 = smul.addr %s123, 4
          %s127 = smul.addr %s126, 8
          %s128 = scalar_lea.hbm %s0, %s127
          %s129 = sshll.u32 %s128, 4
          %s130 = int_to_ptr.hbm [resolvable:$true] %s129
          %s131 = sshll.u32 %s122, 4
          %s132 = int_to_ptr.vmem [resolvable:$true] %s131
          %137 = dma.hbm_to_vmem [thread:$0]  %s130, 32768, %s132, %s119, 512, 512, 32
        $region20: #{tpu_custom_call.1} parent=15 // pred_fallthru
          _
      $region16: #{tpu_custom_call.1} parent=5 // pred_fallthru
        _
      %p138 = scmp.le.s32.totalorder 1, %s18
      %p139 = scmp.lt.s32.totalorder %s18, 3
      %p140 = pnand %p138, %p139
      %p141 = pneg %p140
      // Predicated region
      $region21: #{tpu_custom_call.1} parent=5 // pred_check
        _
      $region22: #{tpu_custom_call.1} parent=5 // pred_check_branch
        %143 = sbr.rel (%p140) target = $region24
      $region23: #{tpu_custom_call.1} parent=5 // pred_region
        %s144 = ssub.s32 %s18, 1
        %s145 = sand.u32 %s31, 1
        %s146 = scalar_lea.sflag [#allocation3], %s145
        %s147 = sand.u32 %s31, 1
        %s148 = smul.addr %s147, 2048
        %s149 = scalar_lea.vmem [#allocation2], %s148
        // Predicated region
        $region25: #{tpu_custom_call.1} parent=23 // pred_check
          %p150 = pneg %p44
        $region26: #{tpu_custom_call.1} parent=23 // pred_check_branch
          %152 = sbr.rel (%p150) target = $region28
        $region27: #{tpu_custom_call.1} parent=23 // pred_region
          %154 = dma.done %s146, 32768
        $region28: #{tpu_custom_call.1} parent=23 // pred_fallthru
          _
        %s155 = sand.u32 %s31, 1
        %s156 = scalar_lea.sflag [#allocation3], %s155
        %s157 = sand.u32 %s31, 1
        %s158 = smul.addr %s157, 2048
        %s159 = scalar_lea.vmem [#allocation2], %s158
        %p160 = pneg %p44
        %p161 = pneg %p41
        %p162 = pneg %p70
        %p163 = pneg %p67
        %s164 = sand.u32 %s57, 1
        %s165 = scalar_lea.sflag [#allocation4], %s164
        %s166 = sand.u32 %s57, 1
        %s167 = smul.addr %s166, 1536
        %s168 = scalar_lea.vmem [#allocation5], %s167
        %p169 = pneg %p96
        %p170 = pneg %p93
        %s171 = sand.u32 %s83, 1
        %s172 = scalar_lea.sflag [#allocation7], %s171
        %s173 = sand.u32 %s83, 1
        %s174 = smul.addr %s173, 512
        %s175 = scalar_lea.vmem [#allocation6], %s174
        %s176 = smul.u32 64, %s23
        %s177 = smul.u32 64, %s23
        %s178 = smul.u32 64, %s23
        %v179 = vld [vmem:[%s149] sm:$0xff]
        %v180 = vld [vmem:[%s149 + $0x8] sm:$0xff]
        %v181 = vld [vmem:[%s149 + $0x10] sm:$0xff]
        %v182 = vld [vmem:[%s149 + $0x18] sm:$0xff]
        %v183 = vld [vmem:[%s149 + $0x20] sm:$0xff]
        %v184 = vld [vmem:[%s149 + $0x28] sm:$0xff]
        %v185 = vld [vmem:[%s149 + $0x30] sm:$0xff]
        %v186 = vld [vmem:[%s149 + $0x38] sm:$0xff]
        %v187 = vld [vmem:[%s149 + $0x40] sm:$0xff]
        %v188 = vld [vmem:[%s149 + $0x48] sm:$0xff]
        %v189 = vld [vmem:[%s149 + $0x50] sm:$0xff]
        %v190 = vld [vmem:[%s149 + $0x58] sm:$0xff]
        %v191 = vld [vmem:[%s149 + $0x60] sm:$0xff]
        %v192 = vld [vmem:[%s149 + $0x68] sm:$0xff]
        %v193 = vld [vmem:[%s149 + $0x70] sm:$0xff]
        %v194 = vld [vmem:[%s149 + $0x78] sm:$0xff]
        %v195 = vld [vmem:[%s149 + $0x80] sm:$0xff]
        %v196 = vld [vmem:[%s149 + $0x88] sm:$0xff]
        %v197 = vld [vmem:[%s149 + $0x90] sm:$0xff]
        %v198 = vld [vmem:[%s149 + $0x98] sm:$0xff]
        %v199 = vld [vmem:[%s149 + $0xa0] sm:$0xff]
        %v200 = vld [vmem:[%s149 + $0xa8] sm:$0xff]
        %v201 = vld [vmem:[%s149 + $0xb0] sm:$0xff]
        %v202 = vld [vmem:[%s149 + $0xb8] sm:$0xff]
        %v203 = vld [vmem:[%s149 + $0xc0] sm:$0xff]
        %v204 = vld [vmem:[%s149 + $0xc8] sm:$0xff]
        %v205 = vld [vmem:[%s149 + $0xd0] sm:$0xff]
        %v206 = vld [vmem:[%s149 + $0xd8] sm:$0xff]
        %v207 = vld [vmem:[%s149 + $0xe0] sm:$0xff]
        %v208 = vld [vmem:[%s149 + $0xe8] sm:$0xff]
        %v209 = vld [vmem:[%s149 + $0xf0] sm:$0xff]
        %v210 = vld [vmem:[%s149 + $0xf8] sm:$0xff]
        %v211 = vld [vmem:[%s149 + $0x100] sm:$0xff]
        %v212 = vld [vmem:[%s149 + $0x108] sm:$0xff]
        %v213 = vld [vmem:[%s149 + $0x110] sm:$0xff]
        %v214 = vld [vmem:[%s149 + $0x118] sm:$0xff]
        %v215 = vld [vmem:[%s149 + $0x120] sm:$0xff]
        %v216 = vld [vmem:[%s149 + $0x128] sm:$0xff]
        %v217 = vld [vmem:[%s149 + $0x130] sm:$0xff]
        %v218 = vld [vmem:[%s149 + $0x138] sm:$0xff]
        %v219 = vld [vmem:[%s149 + $0x140] sm:$0xff]
        %v220 = vld [vmem:[%s149 + $0x148] sm:$0xff]
        %v221 = vld [vmem:[%s149 + $0x150] sm:$0xff]
        %v222 = vld [vmem:[%s149 + $0x158] sm:$0xff]
        %v223 = vld [vmem:[%s149 + $0x160] sm:$0xff]
        %v224 = vld [vmem:[%s149 + $0x168] sm:$0xff]
        %v225 = vld [vmem:[%s149 + $0x170] sm:$0xff]
        %v226 = vld [vmem:[%s149 + $0x178] sm:$0xff]
        %v227 = vld [vmem:[%s149 + $0x180] sm:$0xff]
        %v228 = vld [vmem:[%s149 + $0x188] sm:$0xff]
        %v229 = vld [vmem:[%s149 + $0x190] sm:$0xff]
        %v230 = vld [vmem:[%s149 + $0x198] sm:$0xff]
        %v231 = vld [vmem:[%s149 + $0x1a0] sm:$0xff]
        %v232 = vld [vmem:[%s149 + $0x1a8] sm:$0xff]
        %v233 = vld [vmem:[%s149 + $0x1b0] sm:$0xff]
        %v234 = vld [vmem:[%s149 + $0x1b8] sm:$0xff]
        %v235 = vld [vmem:[%s149 + $0x1c0] sm:$0xff]
        %v236 = vld [vmem:[%s149 + $0x1c8] sm:$0xff]
        %v237 = vld [vmem:[%s149 + $0x1d0] sm:$0xff]
        %v238 = vld [vmem:[%s149 + $0x1d8] sm:$0xff]
        %v239 = vld [vmem:[%s149 + $0x1e0] sm:$0xff]
        %v240 = vld [vmem:[%s149 + $0x1e8] sm:$0xff]
        %v241 = vld [vmem:[%s149 + $0x1f0] sm:$0xff]
        %v242 = vld [vmem:[%s149 + $0x1f8] sm:$0xff]
        %v243 = vld [vmem:[%s149 + $0x200] sm:$0xff]
        %v244 = vld [vmem:[%s149 + $0x208] sm:$0xff]
        %v245 = vld [vmem:[%s149 + $0x210] sm:$0xff]
        %v246 = vld [vmem:[%s149 + $0x218] sm:$0xff]
        %v247 = vld [vmem:[%s149 + $0x220] sm:$0xff]
        %v248 = vld [vmem:[%s149 + $0x228] sm:$0xff]
        %v249 = vld [vmem:[%s149 + $0x230] sm:$0xff]
        %v250 = vld [vmem:[%s149 + $0x238] sm:$0xff]
        %v251 = vld [vmem:[%s149 + $0x240] sm:$0xff]
        %v252 = vld [vmem:[%s149 + $0x248] sm:$0xff]
        %v253 = vld [vmem:[%s149 + $0x250] sm:$0xff]
        %v254 = vld [vmem:[%s149 + $0x258] sm:$0xff]
        %v255 = vld [vmem:[%s149 + $0x260] sm:$0xff]
        %v256 = vld [vmem:[%s149 + $0x268] sm:$0xff]
        %v257 = vld [vmem:[%s149 + $0x270] sm:$0xff]
        %v258 = vld [vmem:[%s149 + $0x278] sm:$0xff]
        %v259 = vld [vmem:[%s149 + $0x280] sm:$0xff]
        %v260 = vld [vmem:[%s149 + $0x288] sm:$0xff]
        %v261 = vld [vmem:[%s149 + $0x290] sm:$0xff]
        %v262 = vld [vmem:[%s149 + $0x298] sm:$0xff]
        %v263 = vld [vmem:[%s149 + $0x2a0] sm:$0xff]
        %v264 = vld [vmem:[%s149 + $0x2a8] sm:$0xff]
        %v265 = vld [vmem:[%s149 + $0x2b0] sm:$0xff]
        %v266 = vld [vmem:[%s149 + $0x2b8] sm:$0xff]
        %v267 = vld [vmem:[%s149 + $0x2c0] sm:$0xff]
        %v268 = vld [vmem:[%s149 + $0x2c8] sm:$0xff]
        %v269 = vld [vmem:[%s149 + $0x2d0] sm:$0xff]
        %v270 = vld [vmem:[%s149 + $0x2d8] sm:$0xff]
        %v271 = vld [vmem:[%s149 + $0x2e0] sm:$0xff]
        %v272 = vld [vmem:[%s149 + $0x2e8] sm:$0xff]
        %v273 = vld [vmem:[%s149 + $0x2f0] sm:$0xff]
        %v274 = vld [vmem:[%s149 + $0x2f8] sm:$0xff]
        %v275 = vld [vmem:[%s149 + $0x300] sm:$0xff]
        %v276 = vld [vmem:[%s149 + $0x308] sm:$0xff]
        %v277 = vld [vmem:[%s149 + $0x310] sm:$0xff]
        %v278 = vld [vmem:[%s149 + $0x318] sm:$0xff]
        %v279 = vld [vmem:[%s149 + $0x320] sm:$0xff]
        %v280 = vld [vmem:[%s149 + $0x328] sm:$0xff]
        %v281 = vld [vmem:[%s149 + $0x330] sm:$0xff]
        %v282 = vld [vmem:[%s149 + $0x338] sm:$0xff]
        %v283 = vld [vmem:[%s149 + $0x340] sm:$0xff]
        %v284 = vld [vmem:[%s149 + $0x348] sm:$0xff]
        %v285 = vld [vmem:[%s149 + $0x350] sm:$0xff]
        %v286 = vld [vmem:[%s149 + $0x358] sm:$0xff]
        %v287 = vld [vmem:[%s149 + $0x360] sm:$0xff]
        %v288 = vld [vmem:[%s149 + $0x368] sm:$0xff]
        %v289 = vld [vmem:[%s149 + $0x370] sm:$0xff]
        %v290 = vld [vmem:[%s149 + $0x378] sm:$0xff]
        %v291 = vld [vmem:[%s149 + $0x380] sm:$0xff]
        %v292 = vld [vmem:[%s149 + $0x388] sm:$0xff]
        %v293 = vld [vmem:[%s149 + $0x390] sm:$0xff]
        %v294 = vld [vmem:[%s149 + $0x398] sm:$0xff]
        %v295 = vld [vmem:[%s149 + $0x3a0] sm:$0xff]
        %v296 = vld [vmem:[%s149 + $0x3a8] sm:$0xff]
        %v297 = vld [vmem:[%s149 + $0x3b0] sm:$0xff]
        %v298 = vld [vmem:[%s149 + $0x3b8] sm:$0xff]
        %v299 = vld [vmem:[%s149 + $0x3c0] sm:$0xff]
        %v300 = vld [vmem:[%s149 + $0x3c8] sm:$0xff]
        %v301 = vld [vmem:[%s149 + $0x3d0] sm:$0xff]
        %v302 = vld [vmem:[%s149 + $0x3d8] sm:$0xff]
        %v303 = vld [vmem:[%s149 + $0x3e0] sm:$0xff]
        %v304 = vld [vmem:[%s149 + $0x3e8] sm:$0xff]
        %v305 = vld [vmem:[%s149 + $0x3f0] sm:$0xff]
        %v306 = vld [vmem:[%s149 + $0x3f8] sm:$0xff]
        %v307 = vld [vmem:[%s149 + $0x400] sm:$0xff]
        %v308 = vld [vmem:[%s149 + $0x408] sm:$0xff]
        %v309 = vld [vmem:[%s149 + $0x410] sm:$0xff]
        %v310 = vld [vmem:[%s149 + $0x418] sm:$0xff]
        %v311 = vld [vmem:[%s149 + $0x420] sm:$0xff]
        %v312 = vld [vmem:[%s149 + $0x428] sm:$0xff]
        %v313 = vld [vmem:[%s149 + $0x430] sm:$0xff]
        %v314 = vld [vmem:[%s149 + $0x438] sm:$0xff]
        %v315 = vld [vmem:[%s149 + $0x440] sm:$0xff]
        %v316 = vld [vmem:[%s149 + $0x448] sm:$0xff]
        %v317 = vld [vmem:[%s149 + $0x450] sm:$0xff]
        %v318 = vld [vmem:[%s149 + $0x458] sm:$0xff]
        %v319 = vld [vmem:[%s149 + $0x460] sm:$0xff]
        %v320 = vld [vmem:[%s149 + $0x468] sm:$0xff]
        %v321 = vld [vmem:[%s149 + $0x470] sm:$0xff]
        %v322 = vld [vmem:[%s149 + $0x478] sm:$0xff]
        %v323 = vld [vmem:[%s149 + $0x480] sm:$0xff]
        %v324 = vld [vmem:[%s149 + $0x488] sm:$0xff]
        %v325 = vld [vmem:[%s149 + $0x490] sm:$0xff]
        %v326 = vld [vmem:[%s149 + $0x498] sm:$0xff]
        %v327 = vld [vmem:[%s149 + $0x4a0] sm:$0xff]
        %v328 = vld [vmem:[%s149 + $0x4a8] sm:$0xff]
        %v329 = vld [vmem:[%s149 + $0x4b0] sm:$0xff]
        %v330 = vld [vmem:[%s149 + $0x4b8] sm:$0xff]
        %v331 = vld [vmem:[%s149 + $0x4c0] sm:$0xff]
        %v332 = vld [vmem:[%s149 + $0x4c8] sm:$0xff]
        %v333 = vld [vmem:[%s149 + $0x4d0] sm:$0xff]
        %v334 = vld [vmem:[%s149 + $0x4d8] sm:$0xff]
        %v335 = vld [vmem:[%s149 + $0x4e0] sm:$0xff]
        %v336 = vld [vmem:[%s149 + $0x4e8] sm:$0xff]
        %v337 = vld [vmem:[%s149 + $0x4f0] sm:$0xff]
        %v338 = vld [vmem:[%s149 + $0x4f8] sm:$0xff]
        %v339 = vld [vmem:[%s149 + $0x500] sm:$0xff]
        %v340 = vld [vmem:[%s149 + $0x508] sm:$0xff]
        %v341 = vld [vmem:[%s149 + $0x510] sm:$0xff]
        %v342 = vld [vmem:[%s149 + $0x518] sm:$0xff]
        %v343 = vld [vmem:[%s149 + $0x520] sm:$0xff]
        %v344 = vld [vmem:[%s149 + $0x528] sm:$0xff]
        %v345 = vld [vmem:[%s149 + $0x530] sm:$0xff]
        %v346 = vld [vmem:[%s149 + $0x538] sm:$0xff]
        %v347 = vld [vmem:[%s149 + $0x540] sm:$0xff]
        %v348 = vld [vmem:[%s149 + $0x548] sm:$0xff]
        %v349 = vld [vmem:[%s149 + $0x550] sm:$0xff]
        %v350 = vld [vmem:[%s149 + $0x558] sm:$0xff]
        %v351 = vld [vmem:[%s149 + $0x560] sm:$0xff]
        %v352 = vld [vmem:[%s149 + $0x568] sm:$0xff]
        %v353 = vld [vmem:[%s149 + $0x570] sm:$0xff]
        %v354 = vld [vmem:[%s149 + $0x578] sm:$0xff]
        %v355 = vld [vmem:[%s149 + $0x580] sm:$0xff]
        %v356 = vld [vmem:[%s149 + $0x588] sm:$0xff]
        %v357 = vld [vmem:[%s149 + $0x590] sm:$0xff]
        %v358 = vld [vmem:[%s149 + $0x598] sm:$0xff]
        %v359 = vld [vmem:[%s149 + $0x5a0] sm:$0xff]
        %v360 = vld [vmem:[%s149 + $0x5a8] sm:$0xff]
        %v361 = vld [vmem:[%s149 + $0x5b0] sm:$0xff]
        %v362 = vld [vmem:[%s149 + $0x5b8] sm:$0xff]
        %v363 = vld [vmem:[%s149 + $0x5c0] sm:$0xff]
        %v364 = vld [vmem:[%s149 + $0x5c8] sm:$0xff]
        %v365 = vld [vmem:[%s149 + $0x5d0] sm:$0xff]
        %v366 = vld [vmem:[%s149 + $0x5d8] sm:$0xff]
        %v367 = vld [vmem:[%s149 + $0x5e0] sm:$0xff]
        %v368 = vld [vmem:[%s149 + $0x5e8] sm:$0xff]
        %v369 = vld [vmem:[%s149 + $0x5f0] sm:$0xff]
        %v370 = vld [vmem:[%s149 + $0x5f8] sm:$0xff]
        %v371 = vld [vmem:[%s149 + $0x600] sm:$0xff]
        %v372 = vld [vmem:[%s149 + $0x608] sm:$0xff]
        %v373 = vld [vmem:[%s149 + $0x610] sm:$0xff]
        %v374 = vld [vmem:[%s149 + $0x618] sm:$0xff]
        %v375 = vld [vmem:[%s149 + $0x620] sm:$0xff]
        %v376 = vld [vmem:[%s149 + $0x628] sm:$0xff]
        %v377 = vld [vmem:[%s149 + $0x630] sm:$0xff]
        %v378 = vld [vmem:[%s149 + $0x638] sm:$0xff]
        %v379 = vld [vmem:[%s149 + $0x640] sm:$0xff]
        %v380 = vld [vmem:[%s149 + $0x648] sm:$0xff]
        %v381 = vld [vmem:[%s149 + $0x650] sm:$0xff]
        %v382 = vld [vmem:[%s149 + $0x658] sm:$0xff]
        %v383 = vld [vmem:[%s149 + $0x660] sm:$0xff]
        %v384 = vld [vmem:[%s149 + $0x668] sm:$0xff]
        %v385 = vld [vmem:[%s149 + $0x670] sm:$0xff]
        %v386 = vld [vmem:[%s149 + $0x678] sm:$0xff]
        %v387 = vld [vmem:[%s149 + $0x680] sm:$0xff]
        %v388 = vld [vmem:[%s149 + $0x688] sm:$0xff]
        %v389 = vld [vmem:[%s149 + $0x690] sm:$0xff]
        %v390 = vld [vmem:[%s149 + $0x698] sm:$0xff]
        %v391 = vld [vmem:[%s149 + $0x6a0] sm:$0xff]
        %v392 = vld [vmem:[%s149 + $0x6a8] sm:$0xff]
        %v393 = vld [vmem:[%s149 + $0x6b0] sm:$0xff]
        %v394 = vld [vmem:[%s149 + $0x6b8] sm:$0xff]
        %v395 = vld [vmem:[%s149 + $0x6c0] sm:$0xff]
        %v396 = vld [vmem:[%s149 + $0x6c8] sm:$0xff]
        %v397 = vld [vmem:[%s149 + $0x6d0] sm:$0xff]
        %v398 = vld [vmem:[%s149 + $0x6d8] sm:$0xff]
        %v399 = vld [vmem:[%s149 + $0x6e0] sm:$0xff]
        %v400 = vld [vmem:[%s149 + $0x6e8] sm:$0xff]
        %v401 = vld [vmem:[%s149 + $0x6f0] sm:$0xff]
        %v402 = vld [vmem:[%s149 + $0x6f8] sm:$0xff]
        %v403 = vld [vmem:[%s149 + $0x700] sm:$0xff]
        %v404 = vld [vmem:[%s149 + $0x708] sm:$0xff]
        %v405 = vld [vmem:[%s149 + $0x710] sm:$0xff]
        %v406 = vld [vmem:[%s149 + $0x718] sm:$0xff]
        %v407 = vld [vmem:[%s149 + $0x720] sm:$0xff]
        %v408 = vld [vmem:[%s149 + $0x728] sm:$0xff]
        %v409 = vld [vmem:[%s149 + $0x730] sm:$0xff]
        %v410 = vld [vmem:[%s149 + $0x738] sm:$0xff]
        %v411 = vld [vmem:[%s149 + $0x740] sm:$0xff]
        %v412 = vld [vmem:[%s149 + $0x748] sm:$0xff]
        %v413 = vld [vmem:[%s149 + $0x750] sm:$0xff]
        %v414 = vld [vmem:[%s149 + $0x758] sm:$0xff]
        %v415 = vld [vmem:[%s149 + $0x760] sm:$0xff]
        %v416 = vld [vmem:[%s149 + $0x768] sm:$0xff]
        %v417 = vld [vmem:[%s149 + $0x770] sm:$0xff]
        %v418 = vld [vmem:[%s149 + $0x778] sm:$0xff]
        %v419 = vld [vmem:[%s149 + $0x780] sm:$0xff]
        %v420 = vld [vmem:[%s149 + $0x788] sm:$0xff]
        %v421 = vld [vmem:[%s149 + $0x790] sm:$0xff]
        %v422 = vld [vmem:[%s149 + $0x798] sm:$0xff]
        %v423 = vld [vmem:[%s149 + $0x7a0] sm:$0xff]
        %v424 = vld [vmem:[%s149 + $0x7a8] sm:$0xff]
        %v425 = vld [vmem:[%s149 + $0x7b0] sm:$0xff]
        %v426 = vld [vmem:[%s149 + $0x7b8] sm:$0xff]
        %v427 = vld [vmem:[%s149 + $0x7c0] sm:$0xff]
        %v428 = vld [vmem:[%s149 + $0x7c8] sm:$0xff]
        %v429 = vld [vmem:[%s149 + $0x7d0] sm:$0xff]
        %v430 = vld [vmem:[%s149 + $0x7d8] sm:$0xff]
        %v431 = vld [vmem:[%s149 + $0x7e0] sm:$0xff]
        %v432 = vld [vmem:[%s149 + $0x7e8] sm:$0xff]
        %v433 = vld [vmem:[%s149 + $0x7f0] sm:$0xff]
        %v434 = vld [vmem:[%s149 + $0x7f8] sm:$0xff]
        %435 = vst [vmem:[%s168] sm:$0xff] %v179
        %436 = vst [vmem:[%s168 + $0x8] sm:$0xff] %v180
        %437 = vst [vmem:[%s168 + $0x10] sm:$0xff] %v181
        %438 = vst [vmem:[%s168 + $0x18] sm:$0xff] %v183
        %439 = vst [vmem:[%s168 + $0x20] sm:$0xff] %v184
        %440 = vst [vmem:[%s168 + $0x28] sm:$0xff] %v185
        %441 = vst [vmem:[%s168 + $0x30] sm:$0xff] %v187
        %442 = vst [vmem:[%s168 + $0x38] sm:$0xff] %v188
        %443 = vst [vmem:[%s168 + $0x40] sm:$0xff] %v189
        %444 = vst [vmem:[%s168 + $0x48] sm:$0xff] %v191
        %445 = vst [vmem:[%s168 + $0x50] sm:$0xff] %v192
        %446 = vst [vmem:[%s168 + $0x58] sm:$0xff] %v193
        %447 = vst [vmem:[%s168 + $0x60] sm:$0xff] %v195
        %448 = vst [vmem:[%s168 + $0x68] sm:$0xff] %v196
        %449 = vst [vmem:[%s168 + $0x70] sm:$0xff] %v197
        %450 = vst [vmem:[%s168 + $0x78] sm:$0xff] %v199
        %451 = vst [vmem:[%s168 + $0x80] sm:$0xff] %v200
        %452 = vst [vmem:[%s168 + $0x88] sm:$0xff] %v201
        %453 = vst [vmem:[%s168 + $0x90] sm:$0xff] %v203
        %454 = vst [vmem:[%s168 + $0x98] sm:$0xff] %v204
        %455 = vst [vmem:[%s168 + $0xa0] sm:$0xff] %v205
        %456 = vst [vmem:[%s168 + $0xa8] sm:$0xff] %v207
        %457 = vst [vmem:[%s168 + $0xb0] sm:$0xff] %v208
        %458 = vst [vmem:[%s168 + $0xb8] sm:$0xff] %v209
        %459 = vst [vmem:[%s168 + $0xc0] sm:$0xff] %v211
        %460 = vst [vmem:[%s168 + $0xc8] sm:$0xff] %v212
        %461 = vst [vmem:[%s168 + $0xd0] sm:$0xff] %v213
        %462 = vst [vmem:[%s168 + $0xd8] sm:$0xff] %v215
        %463 = vst [vmem:[%s168 + $0xe0] sm:$0xff] %v216
        %464 = vst [vmem:[%s168 + $0xe8] sm:$0xff] %v217
        %465 = vst [vmem:[%s168 + $0xf0] sm:$0xff] %v219
        %466 = vst [vmem:[%s168 + $0xf8] sm:$0xff] %v220
        %467 = vst [vmem:[%s168 + $0x100] sm:$0xff] %v221
        %468 = vst [vmem:[%s168 + $0x108] sm:$0xff] %v223
        %469 = vst [vmem:[%s168 + $0x110] sm:$0xff] %v224
        %470 = vst [vmem:[%s168 + $0x118] sm:$0xff] %v225
        %471 = vst [vmem:[%s168 + $0x120] sm:$0xff] %v227
        %472 = vst [vmem:[%s168 + $0x128] sm:$0xff] %v228
        %473 = vst [vmem:[%s168 + $0x130] sm:$0xff] %v229
        %474 = vst [vmem:[%s168 + $0x138] sm:$0xff] %v231
        %475 = vst [vmem:[%s168 + $0x140] sm:$0xff] %v232
        %476 = vst [vmem:[%s168 + $0x148] sm:$0xff] %v233
        %477 = vst [vmem:[%s168 + $0x150] sm:$0xff] %v235
        %478 = vst [vmem:[%s168 + $0x158] sm:$0xff] %v236
        %479 = vst [vmem:[%s168 + $0x160] sm:$0xff] %v237
        %480 = vst [vmem:[%s168 + $0x168] sm:$0xff] %v239
        %481 = vst [vmem:[%s168 + $0x170] sm:$0xff] %v240
        %482 = vst [vmem:[%s168 + $0x178] sm:$0xff] %v241
        %483 = vst [vmem:[%s168 + $0x180] sm:$0xff] %v243
        %484 = vst [vmem:[%s168 + $0x188] sm:$0xff] %v244
        %485 = vst [vmem:[%s168 + $0x190] sm:$0xff] %v245
        %486 = vst [vmem:[%s168 + $0x198] sm:$0xff] %v247
        %487 = vst [vmem:[%s168 + $0x1a0] sm:$0xff] %v248
        %488 = vst [vmem:[%s168 + $0x1a8] sm:$0xff] %v249
        %489 = vst [vmem:[%s168 + $0x1b0] sm:$0xff] %v251
        %490 = vst [vmem:[%s168 + $0x1b8] sm:$0xff] %v252
        %491 = vst [vmem:[%s168 + $0x1c0] sm:$0xff] %v253
        %492 = vst [vmem:[%s168 + $0x1c8] sm:$0xff] %v255
        %493 = vst [vmem:[%s168 + $0x1d0] sm:$0xff] %v256
        %494 = vst [vmem:[%s168 + $0x1d8] sm:$0xff] %v257
        %495 = vst [vmem:[%s168 + $0x1e0] sm:$0xff] %v259
        %496 = vst [vmem:[%s168 + $0x1e8] sm:$0xff] %v260
        %497 = vst [vmem:[%s168 + $0x1f0] sm:$0xff] %v261
        %498 = vst [vmem:[%s168 + $0x1f8] sm:$0xff] %v263
        %499 = vst [vmem:[%s168 + $0x200] sm:$0xff] %v264
        %500 = vst [vmem:[%s168 + $0x208] sm:$0xff] %v265
        %501 = vst [vmem:[%s168 + $0x210] sm:$0xff] %v267
        %502 = vst [vmem:[%s168 + $0x218] sm:$0xff] %v268
        %503 = vst [vmem:[%s168 + $0x220] sm:$0xff] %v269
        %504 = vst [vmem:[%s168 + $0x228] sm:$0xff] %v271
        %505 = vst [vmem:[%s168 + $0x230] sm:$0xff] %v272
        %506 = vst [vmem:[%s168 + $0x238] sm:$0xff] %v273
        %507 = vst [vmem:[%s168 + $0x240] sm:$0xff] %v275
        %508 = vst [vmem:[%s168 + $0x248] sm:$0xff] %v276
        %509 = vst [vmem:[%s168 + $0x250] sm:$0xff] %v277
        %510 = vst [vmem:[%s168 + $0x258] sm:$0xff] %v279
        %511 = vst [vmem:[%s168 + $0x260] sm:$0xff] %v280
        %512 = vst [vmem:[%s168 + $0x268] sm:$0xff] %v281
        %513 = vst [vmem:[%s168 + $0x270] sm:$0xff] %v283
        %514 = vst [vmem:[%s168 + $0x278] sm:$0xff] %v284
        %515 = vst [vmem:[%s168 + $0x280] sm:$0xff] %v285
        %516 = vst [vmem:[%s168 + $0x288] sm:$0xff] %v287
        %517 = vst [vmem:[%s168 + $0x290] sm:$0xff] %v288
        %518 = vst [vmem:[%s168 + $0x298] sm:$0xff] %v289
        %519 = vst [vmem:[%s168 + $0x2a0] sm:$0xff] %v291
        %520 = vst [vmem:[%s168 + $0x2a8] sm:$0xff] %v292
        %521 = vst [vmem:[%s168 + $0x2b0] sm:$0xff] %v293
        %522 = vst [vmem:[%s168 + $0x2b8] sm:$0xff] %v295
        %523 = vst [vmem:[%s168 + $0x2c0] sm:$0xff] %v296
        %524 = vst [vmem:[%s168 + $0x2c8] sm:$0xff] %v297
        %525 = vst [vmem:[%s168 + $0x2d0] sm:$0xff] %v299
        %526 = vst [vmem:[%s168 + $0x2d8] sm:$0xff] %v300
        %527 = vst [vmem:[%s168 + $0x2e0] sm:$0xff] %v301
        %528 = vst [vmem:[%s168 + $0x2e8] sm:$0xff] %v303
        %529 = vst [vmem:[%s168 + $0x2f0] sm:$0xff] %v304
        %530 = vst [vmem:[%s168 + $0x2f8] sm:$0xff] %v305
        %531 = vst [vmem:[%s168 + $0x300] sm:$0xff] %v307
        %532 = vst [vmem:[%s168 + $0x308] sm:$0xff] %v308
        %533 = vst [vmem:[%s168 + $0x310] sm:$0xff] %v309
        %534 = vst [vmem:[%s168 + $0x318] sm:$0xff] %v311
        %535 = vst [vmem:[%s168 + $0x320] sm:$0xff] %v312
        %536 = vst [vmem:[%s168 + $0x328] sm:$0xff] %v313
        %537 = vst [vmem:[%s168 + $0x330] sm:$0xff] %v315
        %538 = vst [vmem:[%s168 + $0x338] sm:$0xff] %v316
        %539 = vst [vmem:[%s168 + $0x340] sm:$0xff] %v317
        %540 = vst [vmem:[%s168 + $0x348] sm:$0xff] %v319
        %541 = vst [vmem:[%s168 + $0x350] sm:$0xff] %v320
        %542 = vst [vmem:[%s168 + $0x358] sm:$0xff] %v321
        %543 = vst [vmem:[%s168 + $0x360] sm:$0xff] %v323
        %544 = vst [vmem:[%s168 + $0x368] sm:$0xff] %v324
        %545 = vst [vmem:[%s168 + $0x370] sm:$0xff] %v325
        %546 = vst [vmem:[%s168 + $0x378] sm:$0xff] %v327
        %547 = vst [vmem:[%s168 + $0x380] sm:$0xff] %v328
        %548 = vst [vmem:[%s168 + $0x388] sm:$0xff] %v329
        %549 = vst [vmem:[%s168 + $0x390] sm:$0xff] %v331
        %550 = vst [vmem:[%s168 + $0x398] sm:$0xff] %v332
        %551 = vst [vmem:[%s168 + $0x3a0] sm:$0xff] %v333
        %552 = vst [vmem:[%s168 + $0x3a8] sm:$0xff] %v335
        %553 = vst [vmem:[%s168 + $0x3b0] sm:$0xff] %v336
        %554 = vst [vmem:[%s168 + $0x3b8] sm:$0xff] %v337
        %555 = vst [vmem:[%s168 + $0x3c0] sm:$0xff] %v339
        %556 = vst [vmem:[%s168 + $0x3c8] sm:$0xff] %v340
        %557 = vst [vmem:[%s168 + $0x3d0] sm:$0xff] %v341
        %558 = vst [vmem:[%s168 + $0x3d8] sm:$0xff] %v343
        %559 = vst [vmem:[%s168 + $0x3e0] sm:$0xff] %v344
        %560 = vst [vmem:[%s168 + $0x3e8] sm:$0xff] %v345
        %561 = vst [vmem:[%s168 + $0x3f0] sm:$0xff] %v347
        %562 = vst [vmem:[%s168 + $0x3f8] sm:$0xff] %v348
        %563 = vst [vmem:[%s168 + $0x400] sm:$0xff] %v349
        %564 = vst [vmem:[%s168 + $0x408] sm:$0xff] %v351
        %565 = vst [vmem:[%s168 + $0x410] sm:$0xff] %v352
        %566 = vst [vmem:[%s168 + $0x418] sm:$0xff] %v353
        %567 = vst [vmem:[%s168 + $0x420] sm:$0xff] %v355
        %568 = vst [vmem:[%s168 + $0x428] sm:$0xff] %v356
        %569 = vst [vmem:[%s168 + $0x430] sm:$0xff] %v357
        %570 = vst [vmem:[%s168 + $0x438] sm:$0xff] %v359
        %571 = vst [vmem:[%s168 + $0x440] sm:$0xff] %v360
        %572 = vst [vmem:[%s168 + $0x448] sm:$0xff] %v361
        %573 = vst [vmem:[%s168 + $0x450] sm:$0xff] %v363
        %574 = vst [vmem:[%s168 + $0x458] sm:$0xff] %v364
        %575 = vst [vmem:[%s168 + $0x460] sm:$0xff] %v365
        %576 = vst [vmem:[%s168 + $0x468] sm:$0xff] %v367
        %577 = vst [vmem:[%s168 + $0x470] sm:$0xff] %v368
        %578 = vst [vmem:[%s168 + $0x478] sm:$0xff] %v369
        %579 = vst [vmem:[%s168 + $0x480] sm:$0xff] %v371
        %580 = vst [vmem:[%s168 + $0x488] sm:$0xff] %v372
        %581 = vst [vmem:[%s168 + $0x490] sm:$0xff] %v373
        %582 = vst [vmem:[%s168 + $0x498] sm:$0xff] %v375
        %583 = vst [vmem:[%s168 + $0x4a0] sm:$0xff] %v376
        %584 = vst [vmem:[%s168 + $0x4a8] sm:$0xff] %v377
        %585 = vst [vmem:[%s168 + $0x4b0] sm:$0xff] %v379
        %586 = vst [vmem:[%s168 + $0x4b8] sm:$0xff] %v380
        %587 = vst [vmem:[%s168 + $0x4c0] sm:$0xff] %v381
        %588 = vst [vmem:[%s168 + $0x4c8] sm:$0xff] %v383
        %589 = vst [vmem:[%s168 + $0x4d0] sm:$0xff] %v384
        %590 = vst [vmem:[%s168 + $0x4d8] sm:$0xff] %v385
        %591 = vst [vmem:[%s168 + $0x4e0] sm:$0xff] %v387
        %592 = vst [vmem:[%s168 + $0x4e8] sm:$0xff] %v388
        %593 = vst [vmem:[%s168 + $0x4f0] sm:$0xff] %v389
        %594 = vst [vmem:[%s168 + $0x4f8] sm:$0xff] %v391
        %595 = vst [vmem:[%s168 + $0x500] sm:$0xff] %v392
        %596 = vst [vmem:[%s168 + $0x508] sm:$0xff] %v393
        %597 = vst [vmem:[%s168 + $0x510] sm:$0xff] %v395
        %598 = vst [vmem:[%s168 + $0x518] sm:$0xff] %v396
        %599 = vst [vmem:[%s168 + $0x520] sm:$0xff] %v397
        %600 = vst [vmem:[%s168 + $0x528] sm:$0xff] %v399
        %601 = vst [vmem:[%s168 + $0x530] sm:$0xff] %v400
        %602 = vst [vmem:[%s168 + $0x538] sm:$0xff] %v401
        %603 = vst [vmem:[%s168 + $0x540] sm:$0xff] %v403
        %604 = vst [vmem:[%s168 + $0x548] sm:$0xff] %v404
        %605 = vst [vmem:[%s168 + $0x550] sm:$0xff] %v405
        %606 = vst [vmem:[%s168 + $0x558] sm:$0xff] %v407
        %607 = vst [vmem:[%s168 + $0x560] sm:$0xff] %v408
        %608 = vst [vmem:[%s168 + $0x568] sm:$0xff] %v409
        %609 = vst [vmem:[%s168 + $0x570] sm:$0xff] %v411
        %610 = vst [vmem:[%s168 + $0x578] sm:$0xff] %v412
        %611 = vst [vmem:[%s168 + $0x580] sm:$0xff] %v413
        %612 = vst [vmem:[%s168 + $0x588] sm:$0xff] %v415
        %613 = vst [vmem:[%s168 + $0x590] sm:$0xff] %v416
        %614 = vst [vmem:[%s168 + $0x598] sm:$0xff] %v417
        %615 = vst [vmem:[%s168 + $0x5a0] sm:$0xff] %v419
        %616 = vst [vmem:[%s168 + $0x5a8] sm:$0xff] %v420
        %617 = vst [vmem:[%s168 + $0x5b0] sm:$0xff] %v421
        %618 = vst [vmem:[%s168 + $0x5b8] sm:$0xff] %v423
        %619 = vst [vmem:[%s168 + $0x5c0] sm:$0xff] %v424
        %620 = vst [vmem:[%s168 + $0x5c8] sm:$0xff] %v425
        %621 = vst [vmem:[%s168 + $0x5d0] sm:$0xff] %v427
        %622 = vst [vmem:[%s168 + $0x5d8] sm:$0xff] %v428
        %623 = vst [vmem:[%s168 + $0x5e0] sm:$0xff] %v429
        %624 = vst [vmem:[%s168 + $0x5e8] sm:$0xff] %v431
        %625 = vst [vmem:[%s168 + $0x5f0] sm:$0xff] %v432
        %626 = vst [vmem:[%s168 + $0x5f8] sm:$0xff] %v433
        %627 = vst [vmem:[%s175] sm:$0xff] %v182
        %628 = vst [vmem:[%s175 + $0x8] sm:$0xff] %v186
        %629 = vst [vmem:[%s175 + $0x10] sm:$0xff] %v190
        %630 = vst [vmem:[%s175 + $0x18] sm:$0xff] %v194
        %631 = vst [vmem:[%s175 + $0x20] sm:$0xff] %v198
        %632 = vst [vmem:[%s175 + $0x28] sm:$0xff] %v202
        %633 = vst [vmem:[%s175 + $0x30] sm:$0xff] %v206
        %634 = vst [vmem:[%s175 + $0x38] sm:$0xff] %v210
        %635 = vst [vmem:[%s175 + $0x40] sm:$0xff] %v214
        %636 = vst [vmem:[%s175 + $0x48] sm:$0xff] %v218
        %637 = vst [vmem:[%s175 + $0x50] sm:$0xff] %v222
        %638 = vst [vmem:[%s175 + $0x58] sm:$0xff] %v226
        %639 = vst [vmem:[%s175 + $0x60] sm:$0xff] %v230
        %640 = vst [vmem:[%s175 + $0x68] sm:$0xff] %v234
        %641 = vst [vmem:[%s175 + $0x70] sm:$0xff] %v238
        %642 = vst [vmem:[%s175 + $0x78] sm:$0xff] %v242
        %643 = vst [vmem:[%s175 + $0x80] sm:$0xff] %v246
        %644 = vst [vmem:[%s175 + $0x88] sm:$0xff] %v250
        %645 = vst [vmem:[%s175 + $0x90] sm:$0xff] %v254
        %646 = vst [vmem:[%s175 + $0x98] sm:$0xff] %v258
        %647 = vst [vmem:[%s175 + $0xa0] sm:$0xff] %v262
        %648 = vst [vmem:[%s175 + $0xa8] sm:$0xff] %v266
        %649 = vst [vmem:[%s175 + $0xb0] sm:$0xff] %v270
        %650 = vst [vmem:[%s175 + $0xb8] sm:$0xff] %v274
        %651 = vst [vmem:[%s175 + $0xc0] sm:$0xff] %v278
        %652 = vst [vmem:[%s175 + $0xc8] sm:$0xff] %v282
        %653 = vst [vmem:[%s175 + $0xd0] sm:$0xff] %v286
        %654 = vst [vmem:[%s175 + $0xd8] sm:$0xff] %v290
        %655 = vst [vmem:[%s175 + $0xe0] sm:$0xff] %v294
        %656 = vst [vmem:[%s175 + $0xe8] sm:$0xff] %v298
        %657 = vst [vmem:[%s175 + $0xf0] sm:$0xff] %v302
        %658 = vst [vmem:[%s175 + $0xf8] sm:$0xff] %v306
        %659 = vst [vmem:[%s175 + $0x100] sm:$0xff] %v310
        %660 = vst [vmem:[%s175 + $0x108] sm:$0xff] %v314
        %661 = vst [vmem:[%s175 + $0x110] sm:$0xff] %v318
        %662 = vst [vmem:[%s175 + $0x118] sm:$0xff] %v322
        %663 = vst [vmem:[%s175 + $0x120] sm:$0xff] %v326
        %664 = vst [vmem:[%s175 + $0x128] sm:$0xff] %v330
        %665 = vst [vmem:[%s175 + $0x130] sm:$0xff] %v334
        %666 = vst [vmem:[%s175 + $0x138] sm:$0xff] %v338
        %667 = vst [vmem:[%s175 + $0x140] sm:$0xff] %v342
        %668 = vst [vmem:[%s175 + $0x148] sm:$0xff] %v346
        %669 = vst [vmem:[%s175 + $0x150] sm:$0xff] %v350
        %670 = vst [vmem:[%s175 + $0x158] sm:$0xff] %v354
        %671 = vst [vmem:[%s175 + $0x160] sm:$0xff] %v358
        %672 = vst [vmem:[%s175 + $0x168] sm:$0xff] %v362
        %673 = vst [vmem:[%s175 + $0x170] sm:$0xff] %v366
        %674 = vst [vmem:[%s175 + $0x178] sm:$0xff] %v370
        %675 = vst [vmem:[%s175 + $0x180] sm:$0xff] %v374
        %676 = vst [vmem:[%s175 + $0x188] sm:$0xff] %v378
        %677 = vst [vmem:[%s175 + $0x190] sm:$0xff] %v382
        %678 = vst [vmem:[%s175 + $0x198] sm:$0xff] %v386
        %679 = vst [vmem:[%s175 + $0x1a0] sm:$0xff] %v390
        %680 = vst [vmem:[%s175 + $0x1a8] sm:$0xff] %v394
        %681 = vst [vmem:[%s175 + $0x1b0] sm:$0xff] %v398
        %682 = vst [vmem:[%s175 + $0x1b8] sm:$0xff] %v402
        %683 = vst [vmem:[%s175 + $0x1c0] sm:$0xff] %v406
        %684 = vst [vmem:[%s175 + $0x1c8] sm:$0xff] %v410
        %685 = vst [vmem:[%s175 + $0x1d0] sm:$0xff] %v414
        %686 = vst [vmem:[%s175 + $0x1d8] sm:$0xff] %v418
        %687 = vst [vmem:[%s175 + $0x1e0] sm:$0xff] %v422
        %688 = vst [vmem:[%s175 + $0x1e8] sm:$0xff] %v426
        %689 = vst [vmem:[%s175 + $0x1f0] sm:$0xff] %v430
        %690 = vst [vmem:[%s175 + $0x1f8] sm:$0xff] %v434
        %s691 = sand.u32 %s57, 1
        %s692 = scalar_lea.sflag [#allocation4], %s691
        %s693 = sand.u32 %s57, 1
        %s694 = smul.addr %s693, 1536
        %s695 = scalar_lea.vmem [#allocation5], %s694
        %s696 = sand.u32 %s83, 1
        %s697 = scalar_lea.sflag [#allocation7], %s696
        %s698 = sand.u32 %s83, 1
        %s699 = smul.addr %s698, 512
        %s700 = scalar_lea.vmem [#allocation6], %s699
        // Predicated region
        $region29: #{tpu_custom_call.1} parent=23 // pred_check
          %p701 = pneg %p67
        $region30: #{tpu_custom_call.1} parent=23 // pred_check_branch
          %703 = sbr.rel (%p701) target = $region32
        $region31: #{tpu_custom_call.1} parent=23 // pred_region
          %s704 = smul.u32 64, %s23
          %706 = vsyncadd %s692, 0
          %s707 = smul.addr %s704, 3
          %s708 = smul.addr %s707, 8
          %s709 = scalar_lea.hbm %s1, %s708
          %s710 = sshll.u32 %s695, 4
          %s711 = int_to_ptr.vmem [resolvable:$true] %s710
          %s712 = sshll.u32 %s709, 4
          %s713 = int_to_ptr.hbm [resolvable:$true] %s712
          %718 = dma.vmem_to_hbm [thread:$0]  %s711, 24576, %s713, %s692, 384, 384, 24
        $region32: #{tpu_custom_call.1} parent=23 // pred_fallthru
          _
        // Predicated region
        $region33: #{tpu_custom_call.1} parent=23 // pred_check
          %p719 = pneg %p93
        $region34: #{tpu_custom_call.1} parent=23 // pred_check_branch
          %721 = sbr.rel (%p719) target = $region36
        $region35: #{tpu_custom_call.1} parent=23 // pred_region
          %s722 = smul.u32 64, %s23
          %724 = vsyncadd %s697, 0
          %s725 = smul.addr %s722, 8
          %s726 = scalar_lea.hbm %s2, %s725
          %s727 = sshll.u32 %s700, 4
          %s728 = int_to_ptr.vmem [resolvable:$true] %s727
          %s729 = sshll.u32 %s726, 4
          %s730 = int_to_ptr.hbm [resolvable:$true] %s729
          %735 = dma.vmem_to_hbm [thread:$0]  %s728, 8192, %s730, %s697, 128, 128, 8
        $region36: #{tpu_custom_call.1} parent=23 // pred_fallthru
          _
      $region24: #{tpu_custom_call.1} parent=5 // pred_fallthru
        _
      %p736 = scmp.le.s32.totalorder 2, %s18
      // Predicated region
      $region37: #{tpu_custom_call.1} parent=5 // pred_check
        %p737 = pneg %p736
      $region38: #{tpu_custom_call.1} parent=5 // pred_check_branch
        %739 = sbr.rel (%p737) target = $region40
      $region39: #{tpu_custom_call.1} parent=5 // pred_region
        %s740 = ssub.s32 %s18, 2
        // Predicated region
        $region41: #{tpu_custom_call.1} parent=39 // pred_check
          %p741 = pneg %p73
        $region42: #{tpu_custom_call.1} parent=39 // pred_check_branch
          %743 = sbr.rel (%p741) target = $region44
        $region43: #{tpu_custom_call.1} parent=39 // pred_region
          %s744 = sand.u32 %s58, 1
          %s745 = scalar_lea.sflag [#allocation4], %s744
          %s746 = sand.u32 %s58, 1
          %s747 = smul.addr %s746, 1536
          %s748 = scalar_lea.vmem [#allocation5], %s747
          %750 = dma.done %s745, 24576
        $region44: #{tpu_custom_call.1} parent=39 // pred_fallthru
          _
        // Predicated region
        $region45: #{tpu_custom_call.1} parent=39 // pred_check
          %p751 = pneg %p99
        $region46: #{tpu_custom_call.1} parent=39 // pred_check_branch
          %753 = sbr.rel (%p751) target = $region48
        $region47: #{tpu_custom_call.1} parent=39 // pred_region
          %s754 = sand.u32 %s84, 1
          %s755 = scalar_lea.sflag [#allocation7], %s754
          %s756 = sand.u32 %s84, 1
          %s757 = smul.addr %s756, 512
          %s758 = scalar_lea.vmem [#allocation6], %s757
          %760 = dma.done %s755, 8192
        $region48: #{tpu_custom_call.1} parent=39 // pred_fallthru
          _
      $region40: #{tpu_custom_call.1} parent=5 // pred_fallthru
        _
    $region6: #{tpu_custom_call.1} parent=1 // loop_footer
      %s22 = sadd.s32 1, %s18
    $region7: #{tpu_custom_call.1} parent=1 // loop_footer_branch
      %17 = sbr.rel target = $region3
    $region8: #{tpu_custom_call.1} parent=1 // loop_exit
      _
    %761 = vsyncpa [#allocation3], 1
    %s762 = scalar_lea.sflag [#allocation3], 1
    %763 = vsyncpa %s762, 1
    %764 = vsyncpa [#allocation4], 1
    %s765 = scalar_lea.sflag [#allocation4], 1
    %766 = vsyncpa %s765, 1
    %767 = vsyncpa [#allocation7], 1
    %s768 = scalar_lea.sflag [#allocation7], 1
    %769 = vsyncpa %s768, 1

</llo_original>
